<compile_context>
chip_gen: v7x
topology: tpu7x:2x2x1
jax: 0.10.0
libtpu: 0.0.40
codegen_flags: <defaults>
</compile_context>

<pallas_src>
import functools

import jax
import jax.numpy as jnp
from jax.experimental import pallas as pl
from jax.experimental.pallas import tpu as pltpu


def _round_up(x, m):
    return ((x + m - 1) // m) * m


def _pad2(x, shape, dtype):
    """Zero-pad a 2-D array to `shape` and cast to `dtype` (no-op if already there)."""
    if tuple(x.shape) == tuple(shape) and x.dtype == jnp.dtype(dtype):
        return x
    out = jnp.zeros(shape, dtype)
    return out.at[: x.shape[0], : x.shape[1]].set(x.astype(dtype))


def _largest_tile(np_dim, unit, cap):
    """Largest multiple of `unit` that divides `np_dim` and is <= cap (>= unit)."""
    best = unit
    t = unit
    limit = min(cap, np_dim)
    while t <= limit:
        if np_dim % t == 0:
            best = t
        t += unit
    return best


# ----------------------------------------------------------------------------
# Pallas kernel: one (row-tile, k-tile) step of  sigmoid((2*E - A@E) @ W)
# ----------------------------------------------------------------------------
def scf_layer_kernel(a_ref, ego_k_ref, ego_row_ref, w_ref, out_ref, acc_ref):
    """grid = (rows, k); k is the reduction axis (last, 'arbitrary').

      a_ref:       (tm, tk)       tile of A_hat            (f32 or bf16)
      ego_k_ref:   (tk, DinP)     k-slab of ego            (f32 or bf16)
      ego_row_ref: (tm, DinP)     row-tile of ego (f32; for the 2*E term)
      w_ref:       (DinP, DoutP)  layer weight, lane-padded to mult of 128
      out_ref:     (tm, DoutP)    output tile (f32)
      acc_ref:     (tm, DinP)     f32 accumulator for A @ E
    """
    k = pl.program_id(1)

    @pl.when(k == 0)
    def _():
        acc_ref[...] = jnp.zeros_like(acc_ref)

    # MXU: (tm, tk) @ (tk, DinP) -> (tm, DinP), accumulated in f32.
    acc_ref[...] += jnp.dot(a_ref[...], ego_k_ref[...],
                            preferred_element_type=jnp.float32)

    @pl.when(k == pl.num_programs(1) - 1)
    def _():
        # Epilogue in f32 (v5e VPU/EUP have no bf16): 2*E - A@E, @W, sigmoid.
        h = 2.0 * ego_row_ref[...].astype(jnp.float32) - acc_ref[...]
        z = jnp.dot(h, w_ref[...], preferred_element_type=jnp.float32)
        out_ref[...] = jax.nn.sigmoid(z).astype(out_ref.dtype)


def scf_layer(a_hat, ego, w, *, tm_max=256, tk_max=1024, a_dtype=jnp.float32):
    """Fused SCF layer. a_hat: (N, N), ego: (N, Din), w: (Din, Dout) -> (N, Dout) f32."""
    N, Din = ego.shape
    Dout = w.shape[1]

    # Pad node dim to a multiple of 128 only (keeps quadratic padding overhead
    # small), then pick the largest tile sizes that divide the padded size.
    Np = _round_up(N, 128)
    DinP = _round_up(Din, 128)      # lane-dense ego slabs / accumulator
    DoutP = _round_up(Dout, 128)    # lane-dense output stores

    tm = _largest_tile(Np, 8, tm_max)      # row tile (multiple of 8)
    tk = _largest_tile(Np, 128, tk_max)    # reduction tile (multiple of 128)

    a_p = _pad2(a_hat, (Np, Np), a_dtype)              # streamed N^2 array (bf16-able)
    ego_row_p = _pad2(ego, (Np, DinP), jnp.float32)    # row tiles for the 2*E term
    ego_k_p = (ego_row_p if jnp.dtype(a_dtype) == jnp.dtype(jnp.float32)
               else _pad2(ego, (Np, DinP), a_dtype))   # k-slabs for A @ E
    w_p = _pad2(w, (DinP, DoutP), jnp.float32)         # lane-dense weight

    a_bytes = jnp.dtype(a_dtype).itemsize
    # Double-buffered inputs/outputs + f32 accumulator scratch.
    buf_bytes = (2 * tm * tk * a_bytes
                 + 2 * tk * DinP * a_bytes
                 + 2 * tm * DinP * 4
                 + 2 * DinP * DoutP * 4
                 + 2 * tm * DoutP * 4
                 + tm * DinP * 4)
    # Stay within v7x's 64 MiB physical VMEM.
    vmem_limit = int(min(max(2 * buf_bytes + (8 << 20), 32 << 20), 64 << 20))

    cost = pl.CostEstimate(
        flops=2 * Np * Np * DinP + 2 * Np * DinP * DoutP,
        transcendentals=Np * DoutP,
        bytes_accessed=(Np * Np * a_bytes + Np * DinP * (a_bytes + 4)
                        + DinP * DoutP * 4 + Np * DoutP * 4),
    )

    out = pl.pallas_call(
        scf_layer_kernel,
        out_shape=jax.ShapeDtypeStruct((Np, DoutP), jnp.float32),
        grid_spec=pltpu.PrefetchScalarGridSpec(
            num_scalar_prefetch=0,
            grid=(Np // tm, Np // tk),                     # reduction axis last
            in_specs=[
                pl.BlockSpec((tm, tk), lambda i, k: (i, k)),        # A_hat tile
                pl.BlockSpec((tk, DinP), lambda i, k: (k, 0)),      # ego k-slab
                pl.BlockSpec((tm, DinP), lambda i, k: (i, 0)),      # ego row tile
                pl.BlockSpec((DinP, DoutP), lambda i, k: (0, 0)),   # layer weight
            ],
            out_specs=pl.BlockSpec((tm, DoutP), lambda i, k: (i, 0)),
            scratch_shapes=[pltpu.VMEM((tm, DinP), jnp.float32)],
        ),
        compiler_params=pltpu.CompilerParams(
            dimension_semantics=("parallel", "arbitrary"),
            vmem_limit_bytes=vmem_limit),
        cost_estimate=cost,
    )(a_p, ego_k_p, ego_row_p, w_p)

    return out[:N, :Dout]


# ----------------------------------------------------------------------------
# Parameter / adjacency construction (plain-JAX glue)
# ----------------------------------------------------------------------------
def xavier_uniform(key, shape):
    fan_in, fan_out = shape
    bound = jnp.sqrt(6.0 / (fan_in + fan_out))
    return jax.random.uniform(key, shape, jnp.float32, -bound, bound)


def build_norm_adj(key, n_user, n_item):
    """Symmetric-normalized bipartite adjacency A_hat = D^-1/2 [[0,R],[R^T,0]] D^-1/2."""
    r = (jax.random.uniform(key, (n_user, n_item)) < 0.3).astype(jnp.float32)
    N = n_user + n_item
    adj = jnp.zeros((N, N), jnp.float32)
    adj = adj.at[:n_user, n_user:].set(r)
    adj = adj.at[n_user:, :n_user].set(r.T)
    deg = adj.sum(axis=1)
    d_inv_sqrt = jnp.where(deg > 0, 1.0 / jnp.sqrt(jnp.maximum(deg, 1e-12)), 0.0)
    return d_inv_sqrt[:, None] * adj * d_inv_sqrt[None, :]


def node_dropout_dense(key, a_hat, rate):
    """Dense equivalent of SCF.sparse_dropout: Bernoulli(1-rate) keep mask + 1/(1-rate) rescale.
    (Masking structural zeros is a no-op, so dense masking matches sparse-nnz masking.)"""
    keep = (jax.random.uniform(key, a_hat.shape) >= rate).astype(a_hat.dtype)
    return a_hat * keep * (1.0 / (1.0 - rate))
    # TODO(synk): at large N and >2 layers the dropout mask could be generated
    # in-kernel with pltpu.prng_seed / prng_random_bits (deterministic per-tile
    # seed reused by all layers), saving one full N^2 HBM pass; kept in XLA here.


# ----------------------------------------------------------------------------
# Full SCF forward
# ----------------------------------------------------------------------------
def scf_forward(params, a_hat, users, pos_items, neg_items, n_user,
                *, node_dropout=0.1, drop_flag=True, dropout_key=None,
                layer_fn=scf_layer):
    if drop_flag:
        a = node_dropout_dense(dropout_key, a_hat, node_dropout)
    else:
        a = a_hat

    ego = jnp.concatenate([params["user_emb"], params["item_emb"]], axis=0)
    all_embeddings = [ego]
    for w in params["W_gc"]:
        ego = layer_fn(a, ego, w)
        all_embeddings.append(ego)
    all_embeddings = jnp.concatenate(all_embeddings, axis=1)

    u_g = all_embeddings[:n_user, :]
    i_g = all_embeddings[n_user:, :]
    return u_g[users, :], i_g[pos_items, :], i_g[neg_items, :]


# Pure-JAX reference of a single layer (for correctness check).
def scf_layer_ref(a_hat, ego, w):
    side = a_hat @ ego
    return jax.nn.sigmoid((2.0 * ego - side) @ w)


if __name__ == "__main__":
    # Small, module-consistent shapes.
    n_user, n_item = 16, 16
    emb_size = 32
    layer_sizes = [32, 16]          # args.layer_size
    node_dropout = 0.1              # args.node_dropout[0]
    batch = 4
    N = n_user + n_item

    root = jax.random.PRNGKey(0)
    k_ue, k_ie, k_adj, k_drop, k_idx, *k_w = jax.random.split(root, 5 + len(layer_sizes))

    # Deterministic parameter init (xavier_uniform, as in init_weight).
    dims = [emb_size] + layer_sizes
    params = {
        "user_emb": xavier_uniform(k_ue, (n_user, emb_size)),
        "item_emb": xavier_uniform(k_ie, (n_item, emb_size)),
        "W_gc": [xavier_uniform(k_w[i], (dims[i], dims[i + 1]))
                 for i in range(len(layer_sizes))],
    }

    a_hat = build_norm_adj(k_adj, n_user, n_item)

    ku, kp, kn = jax.random.split(k_idx, 3)
    users = jax.random.randint(ku, (batch,), 0, n_user)
    pos_items = jax.random.randint(kp, (batch,), 0, n_item)
    neg_items = jax.random.randint(kn, (batch,), 0, n_item)

    # Reference forward (same dropout key) in plain JAX.
    u_r, pos_r, neg_r = scf_forward(
        params, a_hat, users, pos_items, neg_items, n_user,
        node_dropout=node_dropout, drop_flag=True, dropout_key=k_drop,
        layer_fn=scf_layer_ref)

    # Forward with the f32 Pallas layer kernel (exact path).
    u_g, pos_g, neg_g = scf_forward(
        params, a_hat, users, pos_items, neg_items, n_user,
        node_dropout=node_dropout, drop_flag=True, dropout_key=k_drop,
        layer_fn=scf_layer)
    jax.block_until_ready((u_g, pos_g, neg_g))

    assert u_g.shape == (batch, emb_size + sum(layer_sizes))
    assert jnp.allclose(u_g, u_r, atol=1e-5)
    assert jnp.allclose(pos_g, pos_r, atol=1e-5)
    assert jnp.allclose(neg_g, neg_r, atol=1e-5)

    # Forward with bf16 A-stream (halves dominant N^2 HBM traffic; f32 accumulate).
    u_b, pos_b, neg_b = scf_forward(
        params, a_hat, users, pos_items, neg_items, n_user,
        node_dropout=node_dropout, drop_flag=True, dropout_key=k_drop,
        layer_fn=functools.partial(scf_layer, a_dtype=jnp.bfloat16))
    jax.block_until_ready((u_b, pos_b, neg_b))
    assert u_b.shape == u_r.shape
    assert jnp.allclose(u_b, u_r, atol=5e-2)
    assert jnp.allclose(pos_b, pos_r, atol=5e-2)
    assert jnp.allclose(neg_b, neg_r, atol=5e-2)

    # TODO(synk): create_bpr_loss / rating heads are training-time helpers, not part of forward; omitted.
    print("KERNEL_OK")
</pallas_src>

<mosaic_0001>
module attributes {stable_mosaic.version = 11 : i64} {
  func.func @scf_layer_kernel(%arg0: i32, %arg1: i32, %arg2: memref<128x128xf32, #tpu.memory_space<vmem>>, %arg3: memref<128x128xf32, #tpu.memory_space<vmem>>, %arg4: memref<128x128xf32, #tpu.memory_space<vmem>>, %arg5: memref<128x128xf32, #tpu.memory_space<vmem>>, %arg6: memref<128x128xf32, #tpu.memory_space<vmem>>, %arg7: memref<128x128xf32, #tpu.memory_space<vmem>>) attributes {dimension_semantics = [#tpu.dimension_semantics<parallel>, #tpu.dimension_semantics<arbitrary>], iteration_bounds = array<i64: 1, 1>, scalar_prefetch = 0 : i64, scratch_operands = 1 : i64, tpu.core_type = #tpu.core_type<tc>, window_params = [{transform_indices = @transform_0, window_bounds = array<i64: 128, 128>}, {transform_indices = @transform_1, window_bounds = array<i64: 128, 128>}, {transform_indices = @transform_2, window_bounds = array<i64: 128, 128>}, {pipeline_mode = #tpu.pipeline_mode<synchronous>, transform_indices = @transform_3, window_bounds = array<i64: 128, 128>}, {transform_indices = @transform_4, window_bounds = array<i64: 128, 128>}]} {
    %c0_i32 = arith.constant 0 : i32
    %0 = arith.cmpi eq, %arg1, %c0_i32 : i32
    %1 = arith.extui %0 : i1 to i32
    %c0_i32_0 = arith.constant 0 : i32
    %2 = arith.cmpi ne, %1, %c0_i32_0 : i32
    scf.if %2 {
      %cst_10 = arith.constant 0.000000e+00 : f32
      %12 = vector.broadcast %cst_10 : f32 to vector<128x128xf32>
      %c0_11 = arith.constant 0 : index
      %c0_12 = arith.constant 0 : index
      %13 = vector.load %arg7[%c0_11, %c0_12] : memref<128x128xf32, #tpu.memory_space<vmem>>, vector<128x128xf32>
      tpu.vector_store %arg7[%c0_11, %c0_12], %12 {strides = array<i32>} : memref<128x128xf32, #tpu.memory_space<vmem>>, vector<128x128xf32>,
    } else {
    }
    %c0 = arith.constant 0 : index
    %c0_1 = arith.constant 0 : index
    %3 = vector.load %arg7[%c0, %c0_1] : memref<128x128xf32, #tpu.memory_space<vmem>>, vector<128x128xf32>
    %c0_2 = arith.constant 0 : index
    %c0_3 = arith.constant 0 : index
    %4 = vector.load %arg2[%c0_2, %c0_3] : memref<128x128xf32, #tpu.memory_space<vmem>>, vector<128x128xf32>
    %c0_4 = arith.constant 0 : index
    %c0_5 = arith.constant 0 : index
    %5 = vector.load %arg3[%c0_4, %c0_5] : memref<128x128xf32, #tpu.memory_space<vmem>>, vector<128x128xf32>
    %cst = arith.constant dense<0.000000e+00> : vector<128x128xf32>
    %6 = tpu.matmul %4, %5, %cst {dimension_numbers = #tpu.dot_dimension_numbers<[1], [0], [0], [1], [0, 0, 1, 1], [], []>} : vector<128x128xf32>, vector<128x128xf32>, vector<128x128xf32> -> vector<128x128xf32>
    %7 = arith.addf %3, %6 : vector<128x128xf32>
    %c0_6 = arith.constant 0 : index
    %c0_7 = arith.constant 0 : index
    %8 = vector.load %arg7[%c0_6, %c0_7] : memref<128x128xf32, #tpu.memory_space<vmem>>, vector<128x128xf32>
    tpu.vector_store %arg7[%c0_6, %c0_7], %7 {strides = array<i32>} : memref<128x128xf32, #tpu.memory_space<vmem>>, vector<128x128xf32>,
    %c0_i32_8 = arith.constant 0 : i32
    %9 = arith.cmpi eq, %arg1, %c0_i32_8 : i32
    %10 = arith.extui %9 : i1 to i32
    %c0_i32_9 = arith.constant 0 : i32
    %11 = arith.cmpi ne, %10, %c0_i32_9 : i32
    scf.if %11 {
      %c0_10 = arith.constant 0 : index
      %c0_11 = arith.constant 0 : index
      %12 = vector.load %arg4[%c0_10, %c0_11] : memref<128x128xf32, #tpu.memory_space<vmem>>, vector<128x128xf32>
      %cst_12 = arith.constant 2.000000e+00 : f32
      %13 = vector.broadcast %cst_12 : f32 to vector<128x128xf32>
      %14 = arith.mulf %13, %12 : vector<128x128xf32>
      %c0_13 = arith.constant 0 : index
      %c0_14 = arith.constant 0 : index
      %15 = vector.load %arg7[%c0_13, %c0_14] : memref<128x128xf32, #tpu.memory_space<vmem>>, vector<128x128xf32>
      %16 = arith.subf %14, %15 : vector<128x128xf32>
      %c0_15 = arith.constant 0 : index
      %c0_16 = arith.constant 0 : index
      %17 = vector.load %arg5[%c0_15, %c0_16] : memref<128x128xf32, #tpu.memory_space<vmem>>, vector<128x128xf32>
      %cst_17 = arith.constant dense<0.000000e+00> : vector<128x128xf32>
      %18 = tpu.matmul %16, %17, %cst_17 {dimension_numbers = #tpu.dot_dimension_numbers<[1], [0], [0], [1], [0, 0, 1, 1], [], []>} : vector<128x128xf32>, vector<128x128xf32>, vector<128x128xf32> -> vector<128x128xf32>
      %19 = arith.negf %18 : vector<128x128xf32>
      %20 = math.exp %19 : vector<128x128xf32>
      %cst_18 = arith.constant 1.000000e+00 : f32
      %21 = vector.broadcast %cst_18 : f32 to vector<128x128xf32>
      %22 = arith.addf %21, %20 : vector<128x128xf32>
      %23 = arith.divf %21, %22 : vector<128x128xf32>
      %c0_19 = arith.constant 0 : index
      %c0_20 = arith.constant 0 : index
      %24 = vector.load %arg6[%c0_19, %c0_20] : memref<128x128xf32, #tpu.memory_space<vmem>>, vector<128x128xf32>
      tpu.vector_store %arg6[%c0_19, %c0_20], %23 {strides = array<i32>} : memref<128x128xf32, #tpu.memory_space<vmem>>, vector<128x128xf32>,
    } else {
    }
    return
  }
  func.func @transform_0(%arg0: i32, %arg1: i32) -> (i32, i32) {
    %c0_i32 = arith.constant 0 : i32
    return %arg0, %arg1 : i32, i32
  }
  func.func @transform_1(%arg0: i32, %arg1: i32) -> (i32, i32) {
    %c0_i32 = arith.constant 0 : i32
    %c0_i32_0 = arith.constant 0 : i32
    return %arg1, %c0_i32 : i32, i32
  }
  func.func @transform_2(%arg0: i32, %arg1: i32) -> (i32, i32) {
    %c0_i32 = arith.constant 0 : i32
    %c0_i32_0 = arith.constant 0 : i32
    return %arg0, %c0_i32 : i32, i32
  }
  func.func @transform_3(%arg0: i32, %arg1: i32) -> (i32, i32) {
    %c0_i32 = arith.constant 0 : i32
    %c0_i32_0 = arith.constant 0 : i32
    %c0_i32_1 = arith.constant 0 : i32
    return %c0_i32, %c0_i32_0 : i32, i32
  }
  func.func @transform_4(%arg0: i32, %arg1: i32) -> (i32, i32) {
    %c0_i32 = arith.constant 0 : i32
    %c0_i32_0 = arith.constant 0 : i32
    return %arg0, %c0_i32 : i32, i32
  }
}

</mosaic_0001>

<llo_original>
// kernel: tpu_custom_call.1
$region0: #{tpu_custom_call.1}
  #allocation0 [shape = 'u32[]', space=smem, size = 0x4, offset = 0x4, fixed_abs, tag = 'smem constant byte address 0x4 - core index']
  #allocation1 [shape = 'u32[144,128]{1,0:T(1,128)}', space=vmem, size = 0x12000, scoped, tag = 'internal scratch']
  #allocation2 [shape = 'f32[128,128]{1,0:T(8,128)}', space=vmem, size = 0x10000, scoped, tag = 'scratch operand']
  %s0 = inlined_call_operand.hbm [shape: f32[128,128], index: 0, kind: input, shape index: {}]
  %s1 = inlined_call_operand.hbm [shape: f32[128,128], index: 1, kind: input, shape index: {}]
  %s2 = inlined_call_operand.hbm [shape: f32[128,128], index: 2, kind: input, shape index: {}]
  %s3 = inlined_call_operand.hbm [shape: f32[128,128], index: 3, kind: input, shape index: {}]
  %s4 = inlined_call_operand.hbm [shape: f32[128,128], index: 4, kind: output, shape index: {}]
  %s5 = sld [smem:[#allocation0]]
  $region50: #{tpu_custom_call.1} parent=0
    _
  %s7 = ssub.s32 1, %s5
  %s8 = scalar_select 0, %s7, %s5
  $region1: #{tpu_custom_call.1} parent=0
    #allocation3 [shape = 'u8[65536]{0}', space=vmem, size = 0x10000, scoped, tag = 'input window, operand 0, single buffered']
    #allocation4 [shape = 's32[1]{0}', space=sflag, size = 0x4, scoped, tag = 'scoped memory for tpu_custom_call.1']
    #allocation5 [shape = 's32[1]{0}', space=sflag, size = 0x4, scoped, tag = 'scoped memory for tpu_custom_call.1']
    #allocation6 [shape = 'u8[65536]{0}', space=vmem, size = 0x10000, scoped, tag = 'input window, operand 1, single buffered']
    #allocation7 [shape = 's32[1]{0}', space=sflag, size = 0x4, scoped, tag = 'scoped memory for tpu_custom_call.1']
    #allocation8 [shape = 'u8[65536]{0}', space=vmem, size = 0x10000, scoped, tag = 'input window, operand 2, single buffered']
    #allocation9 [shape = 'u8[65536]{0}', space=vmem, size = 0x10000, scoped, tag = 'input window, operand 3, single buffered']
    #allocation10 [shape = 's32[1]{0}', space=sflag, size = 0x4, scoped, tag = 'scoped memory for tpu_custom_call.1']
    #allocation11 [shape = 'u8[65536]{0}', space=vmem, size = 0x10000, scoped, tag = 'output window, operand 0, single buffered']
    %9 = vsyncpa [#allocation4], 0
    %10 = vsyncpa [#allocation7], 0
    %11 = vsyncpa [#allocation10], 0
    %12 = vsyncpa [#allocation5], 0
    // Predicated region
    $region2: #{tpu_custom_call.1} parent=1 // pred_check
      _
    $region3: #{tpu_custom_call.1} parent=1 // pred_check_branch
      %14 = sbr.rel (0) target = $region5
    $region4: #{tpu_custom_call.1} parent=1 // pred_region
      %s16 = ssub.s32 2048, 2048
      %17 = vsyncadd [#allocation4], %s16
      %s18 = sshll.u32 [#allocation3], 4
      %s19 = int_to_ptr.vmem [resolvable:$true] %s18
      %24 = dma.hbm_to_vmem [thread:$0]  %s0, 2048, %s19, [#allocation4], 128, 128, 8
    $region5: #{tpu_custom_call.1} parent=1 // pred_fallthru
      _
    // Predicated region
    $region6: #{tpu_custom_call.1} parent=1 // pred_check
      _
    $region7: #{tpu_custom_call.1} parent=1 // pred_check_branch
      %26 = sbr.rel (0) target = $region9
    $region8: #{tpu_custom_call.1} parent=1 // pred_region
      %s28 = ssub.s32 2048, 2048
      %29 = vsyncadd [#allocation7], %s28
      %s30 = sshll.u32 [#allocation6], 4
      %s31 = int_to_ptr.vmem [resolvable:$true] %s30
      %36 = dma.hbm_to_vmem [thread:$0]  %s1, 2048, %s31, [#allocation7], 128, 128, 8
    $region9: #{tpu_custom_call.1} parent=1 // pred_fallthru
      _
    // Predicated region
    $region10: #{tpu_custom_call.1} parent=1 // pred_check
      _
    $region11: #{tpu_custom_call.1} parent=1 // pred_check_branch
      %38 = sbr.rel (0) target = $region13
    $region12: #{tpu_custom_call.1} parent=1 // pred_region
      %s40 = ssub.s32 2048, 2048
      %41 = vsyncadd [#allocation7], %s40
      %s42 = sshll.u32 [#allocation8], 4
      %s43 = int_to_ptr.vmem [resolvable:$true] %s42
      %48 = dma.hbm_to_vmem [thread:$0]  %s2, 2048, %s43, [#allocation7], 128, 128, 8
    $region13: #{tpu_custom_call.1} parent=1 // pred_fallthru
      _
    // Predicated region
    $region14: #{tpu_custom_call.1} parent=1 // pred_check
      _
    $region15: #{tpu_custom_call.1} parent=1 // pred_check_branch
      %50 = sbr.rel (0) target = $region17
    $region16: #{tpu_custom_call.1} parent=1 // pred_region
      %s52 = ssub.s32 2048, 2048
      %53 = vsyncadd [#allocation10], %s52
      %s54 = sshll.u32 [#allocation9], 4
      %s55 = int_to_ptr.vmem [resolvable:$true] %s54
      %60 = dma.hbm_to_vmem [thread:$0]  %s3, 2048, %s55, [#allocation10], 128, 128, 8
    $region17: #{tpu_custom_call.1} parent=1 // pred_fallthru
      _
    // Predicated region
    $region18: #{tpu_custom_call.1} parent=1 // pred_check
      _
    $region19: #{tpu_custom_call.1} parent=1 // pred_check_branch
      %62 = sbr.rel (0) target = $region21
    $region20: #{tpu_custom_call.1} parent=1 // pred_region
      %63 = dma.done [#allocation4], 2048
    $region21: #{tpu_custom_call.1} parent=1 // pred_fallthru
      _
    // Predicated region
    $region22: #{tpu_custom_call.1} parent=1 // pred_check
      _
    $region23: #{tpu_custom_call.1} parent=1 // pred_check_branch
      %65 = sbr.rel (0) target = $region25
    $region24: #{tpu_custom_call.1} parent=1 // pred_region
      %66 = dma.done [#allocation7], 2048
    $region25: #{tpu_custom_call.1} parent=1 // pred_fallthru
      _
    // Predicated region
    $region26: #{tpu_custom_call.1} parent=1 // pred_check
      _
    $region27: #{tpu_custom_call.1} parent=1 // pred_check_branch
      %68 = sbr.rel (0) target = $region29
    $region28: #{tpu_custom_call.1} parent=1 // pred_region
      %69 = dma.done [#allocation7], 2048
    $region29: #{tpu_custom_call.1} parent=1 // pred_fallthru
      _
    // Predicated region
    $region30: #{tpu_custom_call.1} parent=1 // pred_check
      _
    $region31: #{tpu_custom_call.1} parent=1 // pred_check_branch
      %71 = sbr.rel (0) target = $region33
    $region32: #{tpu_custom_call.1} parent=1 // pred_region
      %72 = dma.done [#allocation10], 2048
    $region33: #{tpu_custom_call.1} parent=1 // pred_fallthru
      _
    %p73 = scmp.eq.s32.totalorder 0, 0
    // Predicated region
    $region34: #{tpu_custom_call.1} parent=1 // pred_check
      %p74 = pneg %p73
    $region35: #{tpu_custom_call.1} parent=1 // pred_check_branch
      %76 = sbr.rel (%p74) target = $region37
    $region36: #{tpu_custom_call.1} parent=1 // pred_region
      %77 = vst [vmem:[#allocation2] sm:$0xff] 0.0
      %78 = vst [vmem:[#allocation2 + $0x8] sm:$0xff] 0.0
      %79 = vst [vmem:[#allocation2 + $0x10] sm:$0xff] 0.0
      %80 = vst [vmem:[#allocation2 + $0x18] sm:$0xff] 0.0
      %81 = vst [vmem:[#allocation2 + $0x20] sm:$0xff] 0.0
      %82 = vst [vmem:[#allocation2 + $0x28] sm:$0xff] 0.0
      %83 = vst [vmem:[#allocation2 + $0x30] sm:$0xff] 0.0
      %84 = vst [vmem:[#allocation2 + $0x38] sm:$0xff] 0.0
      %85 = vst [vmem:[#allocation2 + $0x40] sm:$0xff] 0.0
      %86 = vst [vmem:[#allocation2 + $0x48] sm:$0xff] 0.0
      %87 = vst [vmem:[#allocation2 + $0x50] sm:$0xff] 0.0
      %88 = vst [vmem:[#allocation2 + $0x58] sm:$0xff] 0.0
      %89 = vst [vmem:[#allocation2 + $0x60] sm:$0xff] 0.0
      %90 = vst [vmem:[#allocation2 + $0x68] sm:$0xff] 0.0
      %91 = vst [vmem:[#allocation2 + $0x70] sm:$0xff] 0.0
      %92 = vst [vmem:[#allocation2 + $0x78] sm:$0xff] 0.0
    $region37: #{tpu_custom_call.1} parent=1 // pred_fallthru
      _
    %v93 = vld [vmem:[#allocation2] sm:$0xff]
    %v94 = vld [vmem:[#allocation2 + $0x8] sm:$0xff]
    %v95 = vld [vmem:[#allocation2 + $0x10] sm:$0xff]
    %v96 = vld [vmem:[#allocation2 + $0x18] sm:$0xff]
    %v97 = vld [vmem:[#allocation2 + $0x20] sm:$0xff]
    %v98 = vld [vmem:[#allocation2 + $0x28] sm:$0xff]
    %v99 = vld [vmem:[#allocation2 + $0x30] sm:$0xff]
    %v100 = vld [vmem:[#allocation2 + $0x38] sm:$0xff]
    %v101 = vld [vmem:[#allocation2 + $0x40] sm:$0xff]
    %v102 = vld [vmem:[#allocation2 + $0x48] sm:$0xff]
    %v103 = vld [vmem:[#allocation2 + $0x50] sm:$0xff]
    %v104 = vld [vmem:[#allocation2 + $0x58] sm:$0xff]
    %v105 = vld [vmem:[#allocation2 + $0x60] sm:$0xff]
    %v106 = vld [vmem:[#allocation2 + $0x68] sm:$0xff]
    %v107 = vld [vmem:[#allocation2 + $0x70] sm:$0xff]
    %v108 = vld [vmem:[#allocation2 + $0x78] sm:$0xff]
    %v109 = vld [vmem:[#allocation3] sm:$0xff]
    %v110 = vld [vmem:[#allocation3 + $0x8] sm:$0xff]
    %v111 = vld [vmem:[#allocation3 + $0x10] sm:$0xff]
    %v112 = vld [vmem:[#allocation3 + $0x18] sm:$0xff]
    %v113 = vld [vmem:[#allocation3 + $0x20] sm:$0xff]
    %v114 = vld [vmem:[#allocation3 + $0x28] sm:$0xff]
    %v115 = vld [vmem:[#allocation3 + $0x30] sm:$0xff]
    %v116 = vld [vmem:[#allocation3 + $0x38] sm:$0xff]
    %v117 = vld [vmem:[#allocation3 + $0x40] sm:$0xff]
    %v118 = vld [vmem:[#allocation3 + $0x48] sm:$0xff]
    %v119 = vld [vmem:[#allocation3 + $0x50] sm:$0xff]
    %v120 = vld [vmem:[#allocation3 + $0x58] sm:$0xff]
    %v121 = vld [vmem:[#allocation3 + $0x60] sm:$0xff]
    %v122 = vld [vmem:[#allocation3 + $0x68] sm:$0xff]
    %v123 = vld [vmem:[#allocation3 + $0x70] sm:$0xff]
    %v124 = vld [vmem:[#allocation3 + $0x78] sm:$0xff]
    %v125 = vld [vmem:[#allocation6] sm:$0xff]
    %v126 = vld [vmem:[#allocation6 + $0x8] sm:$0xff]
    %v127 = vld [vmem:[#allocation6 + $0x10] sm:$0xff]
    %v128 = vld [vmem:[#allocation6 + $0x18] sm:$0xff]
    %v129 = vld [vmem:[#allocation6 + $0x20] sm:$0xff]
    %v130 = vld [vmem:[#allocation6 + $0x28] sm:$0xff]
    %v131 = vld [vmem:[#allocation6 + $0x30] sm:$0xff]
    %v132 = vld [vmem:[#allocation6 + $0x38] sm:$0xff]
    %v133 = vld [vmem:[#allocation6 + $0x40] sm:$0xff]
    %v134 = vld [vmem:[#allocation6 + $0x48] sm:$0xff]
    %v135 = vld [vmem:[#allocation6 + $0x50] sm:$0xff]
    %v136 = vld [vmem:[#allocation6 + $0x58] sm:$0xff]
    %v137 = vld [vmem:[#allocation6 + $0x60] sm:$0xff]
    %v138 = vld [vmem:[#allocation6 + $0x68] sm:$0xff]
    %v139 = vld [vmem:[#allocation6 + $0x70] sm:$0xff]
    %v140 = vld [vmem:[#allocation6 + $0x78] sm:$0xff]
    %141 = vmatprep.subr.mxu0 0.0
    %142 = vmatpush1.msra.mxu0 %v125
    %143 = vmatprep.subr.mxu0 0.0
    %144 = vmatpush1.msra.mxu0 %v126
    %145 = vmatprep.subr.mxu0 0.0
    %146 = vmatpush1.msra.mxu0 %v127
    %147 = vmatprep.subr.mxu0 0.0
    %148 = vmatpush1.msra.mxu0 %v128
    %149 = vmatprep.subr.mxu0 0.0
    %150 = vmatpush1.msra.mxu0 %v129
    %151 = vmatprep.subr.mxu0 0.0
    %152 = vmatpush1.msra.mxu0 %v130
    %153 = vmatprep.subr.mxu0 0.0
    %154 = vmatpush1.msra.mxu0 %v131
    %155 = vmatprep.subr.mxu0 0.0
    %156 = vmatpush1.msra.mxu0 %v132
    %157 = vmatprep.subr.mxu0 0.0
    %158 = vmatpush1.msra.mxu0 %v133
    %159 = vmatprep.subr.mxu0 0.0
    %160 = vmatpush1.msra.mxu0 %v134
    %161 = vmatprep.subr.mxu0 0.0
    %162 = vmatpush1.msra.mxu0 %v135
    %163 = vmatprep.subr.mxu0 0.0
    %164 = vmatpush1.msra.mxu0 %v136
    %165 = vmatprep.subr.mxu0 0.0
    %166 = vmatpush1.msra.mxu0 %v137
    %167 = vmatprep.subr.mxu0 0.0
    %168 = vmatpush1.msra.mxu0 %v138
    %169 = vmatprep.subr.mxu0 0.0
    %170 = vmatpush1.msra.mxu0 %v139
    %171 = vmatprep.subr.mxu0 0.0
    %172 = vmatpush1.msra.mxu0 %v140
    %173 = vmatprep.subr.mxu0 0.0
    %174 = vmatpush1.msra.mxu0 0.0
    %175 = vmatprep.subr.mxu0 0.0
    %176 = vmatpush1.msra.mxu0 0.0
    %177 = vmatprep.subr.mxu0 0.0
    %178 = vmatpush1.msra.mxu0 0.0
    %179 = vmatprep.subr.mxu0 0.0
    %180 = vmatpush1.msra.mxu0 0.0
    %181 = vmatprep.subr.mxu0 0.0
    %182 = vmatpush1.msra.mxu0 0.0
    %183 = vmatprep.subr.mxu0 0.0
    %184 = vmatpush1.msra.mxu0 0.0
    %185 = vmatprep.subr.mxu0 0.0
    %186 = vmatpush1.msra.mxu0 0.0
    %187 = vmatprep.subr.mxu0 0.0
    %188 = vmatpush1.msra.mxu0 0.0
    %189 = vmatprep.subr.mxu0 0.0
    %190 = vmatpush1.msra.mxu0 0.0
    %191 = vmatprep.subr.mxu0 0.0
    %192 = vmatpush1.msra.mxu0 0.0
    %193 = vmatprep.subr.mxu0 0.0
    %194 = vmatpush1.msra.mxu0 0.0
    %195 = vmatprep.subr.mxu0 0.0
    %196 = vmatpush1.msra.mxu0 0.0
    %197 = vmatprep.subr.mxu0 0.0
    %198 = vmatpush1.msra.mxu0 0.0
    %199 = vmatprep.subr.mxu0 0.0
    %200 = vmatpush1.msra.mxu0 0.0
    %201 = vmatprep.subr.mxu0 0.0
    %202 = vmatpush1.msra.mxu0 0.0
    %203 = vmatprep.subr.mxu0 0.0
    %204 = vmatpush1.msra.mxu0 0.0
    %205 = vmatprep.mubr.f32.mxu0 0.0
    %206 = vmatmul.mubr.f32.gmra.mrb[0].mxu0 %v109
    %v207 = vpop.f32.mrb[0].mxu0
    %v208 = vadd.f32 0.0, %v207
    %v209 = vpop.f32.mrb[0].mxu0
    %210 = vmatprep.mubr.f32.mxu0 0.0
    %211 = vmatmul.mubr.f32.gmra.mrb[0].mxu0 %v110
    %v212 = vpop.f32.mrb[0].mxu0
    %v213 = vadd.f32 0.0, %v212
    %v214 = vpop.f32.mrb[0].mxu0
    %215 = vmatprep.mubr.f32.mxu0 0.0
    %216 = vmatmul.mubr.f32.gmra.mrb[0].mxu0 %v111
    %v217 = vpop.f32.mrb[0].mxu0
    %v218 = vadd.f32 0.0, %v217
    %v219 = vpop.f32.mrb[0].mxu0
    %220 = vmatprep.mubr.f32.mxu0 0.0
    %221 = vmatmul.mubr.f32.gmra.mrb[0].mxu0 %v112
    %v222 = vpop.f32.mrb[0].mxu0
    %v223 = vadd.f32 0.0, %v222
    %v224 = vpop.f32.mrb[0].mxu0
    %225 = vmatprep.mubr.f32.mxu0 0.0
    %226 = vmatmul.mubr.f32.gmra.mrb[0].mxu0 %v113
    %v227 = vpop.f32.mrb[0].mxu0
    %v228 = vadd.f32 0.0, %v227
    %v229 = vpop.f32.mrb[0].mxu0
    %230 = vmatprep.mubr.f32.mxu0 0.0
    %231 = vmatmul.mubr.f32.gmra.mrb[0].mxu0 %v114
    %v232 = vpop.f32.mrb[0].mxu0
    %v233 = vadd.f32 0.0, %v232
    %v234 = vpop.f32.mrb[0].mxu0
    %235 = vmatprep.mubr.f32.mxu0 0.0
    %236 = vmatmul.mubr.f32.gmra.mrb[0].mxu0 %v115
    %v237 = vpop.f32.mrb[0].mxu0
    %v238 = vadd.f32 0.0, %v237
    %v239 = vpop.f32.mrb[0].mxu0
    %240 = vmatprep.mubr.f32.mxu0 0.0
    %241 = vmatmul.mubr.f32.gmra.mrb[0].mxu0 %v116
    %v242 = vpop.f32.mrb[0].mxu0
    %v243 = vadd.f32 0.0, %v242
    %v244 = vpop.f32.mrb[0].mxu0
    %245 = vmatprep.mubr.f32.mxu0 0.0
    %246 = vmatmul.mubr.f32.gmra.mrb[0].mxu0 %v117
    %v247 = vpop.f32.mrb[0].mxu0
    %v248 = vadd.f32 0.0, %v247
    %v249 = vpop.f32.mrb[0].mxu0
    %250 = vmatprep.mubr.f32.mxu0 0.0
    %251 = vmatmul.mubr.f32.gmra.mrb[0].mxu0 %v118
    %v252 = vpop.f32.mrb[0].mxu0
    %v253 = vadd.f32 0.0, %v252
    %v254 = vpop.f32.mrb[0].mxu0
    %255 = vmatprep.mubr.f32.mxu0 0.0
    %256 = vmatmul.mubr.f32.gmra.mrb[0].mxu0 %v119
    %v257 = vpop.f32.mrb[0].mxu0
    %v258 = vadd.f32 0.0, %v257
    %v259 = vpop.f32.mrb[0].mxu0
    %260 = vmatprep.mubr.f32.mxu0 0.0
    %261 = vmatmul.mubr.f32.gmra.mrb[0].mxu0 %v120
    %v262 = vpop.f32.mrb[0].mxu0
    %v263 = vadd.f32 0.0, %v262
    %v264 = vpop.f32.mrb[0].mxu0
    %265 = vmatprep.mubr.f32.mxu0 0.0
    %266 = vmatmul.mubr.f32.gmra.mrb[0].mxu0 %v121
    %v267 = vpop.f32.mrb[0].mxu0
    %v268 = vadd.f32 0.0, %v267
    %v269 = vpop.f32.mrb[0].mxu0
    %270 = vmatprep.mubr.f32.mxu0 0.0
    %271 = vmatmul.mubr.f32.gmra.mrb[0].mxu0 %v122
    %v272 = vpop.f32.mrb[0].mxu0
    %v273 = vadd.f32 0.0, %v272
    %v274 = vpop.f32.mrb[0].mxu0
    %275 = vmatprep.mubr.f32.mxu0 0.0
    %276 = vmatmul.mubr.f32.gmra.mrb[0].mxu0 %v123
    %v277 = vpop.f32.mrb[0].mxu0
    %v278 = vadd.f32 0.0, %v277
    %v279 = vpop.f32.mrb[0].mxu0
    %280 = vmatprep.mubr.f32.mxu0 0.0
    %281 = vmatmul.mubr.f32.gmra.mrb[0].mxu0 %v124
    %v282 = vpop.f32.mrb[0].mxu0
    %v283 = vadd.f32 0.0, %v282
    %v284 = vpop.f32.mrb[0].mxu0
    %285 = vdwg.mxu0
    %v286 = vadd.f32 %v93, %v208
    %v287 = vadd.f32 %v94, %v213
    %v288 = vadd.f32 %v95, %v218
    %v289 = vadd.f32 %v96, %v223
    %v290 = vadd.f32 %v97, %v228
    %v291 = vadd.f32 %v98, %v233
    %v292 = vadd.f32 %v99, %v238
    %v293 = vadd.f32 %v100, %v243
    %v294 = vadd.f32 %v101, %v248
    %v295 = vadd.f32 %v102, %v253
    %v296 = vadd.f32 %v103, %v258
    %v297 = vadd.f32 %v104, %v263
    %v298 = vadd.f32 %v105, %v268
    %v299 = vadd.f32 %v106, %v273
    %v300 = vadd.f32 %v107, %v278
    %v301 = vadd.f32 %v108, %v283
    %302 = vst [vmem:[#allocation2] sm:$0xff] %v286
    %303 = vst [vmem:[#allocation2 + $0x8] sm:$0xff] %v287
    %304 = vst [vmem:[#allocation2 + $0x10] sm:$0xff] %v288
    %305 = vst [vmem:[#allocation2 + $0x18] sm:$0xff] %v289
    %306 = vst [vmem:[#allocation2 + $0x20] sm:$0xff] %v290
    %307 = vst [vmem:[#allocation2 + $0x28] sm:$0xff] %v291
    %308 = vst [vmem:[#allocation2 + $0x30] sm:$0xff] %v292
    %309 = vst [vmem:[#allocation2 + $0x38] sm:$0xff] %v293
    %310 = vst [vmem:[#allocation2 + $0x40] sm:$0xff] %v294
    %311 = vst [vmem:[#allocation2 + $0x48] sm:$0xff] %v295
    %312 = vst [vmem:[#allocation2 + $0x50] sm:$0xff] %v296
    %313 = vst [vmem:[#allocation2 + $0x58] sm:$0xff] %v297
    %314 = vst [vmem:[#allocation2 + $0x60] sm:$0xff] %v298
    %315 = vst [vmem:[#allocation2 + $0x68] sm:$0xff] %v299
    %316 = vst [vmem:[#allocation2 + $0x70] sm:$0xff] %v300
    %317 = vst [vmem:[#allocation2 + $0x78] sm:$0xff] %v301
    // Predicated region
    $region38: #{tpu_custom_call.1} parent=1 // pred_check
      %p318 = pneg %p73
    $region39: #{tpu_custom_call.1} parent=1 // pred_check_branch
      %320 = sbr.rel (%p318) target = $region41
    $region40: #{tpu_custom_call.1} parent=1 // pred_region
      %v321 = vld [vmem:[#allocation8] sm:$0xff]
      %v322 = vld [vmem:[#allocation8 + $0x8] sm:$0xff]
      %v323 = vld [vmem:[#allocation8 + $0x10] sm:$0xff]
      %v324 = vld [vmem:[#allocation8 + $0x18] sm:$0xff]
      %v325 = vld [vmem:[#allocation8 + $0x20] sm:$0xff]
      %v326 = vld [vmem:[#allocation8 + $0x28] sm:$0xff]
      %v327 = vld [vmem:[#allocation8 + $0x30] sm:$0xff]
      %v328 = vld [vmem:[#allocation8 + $0x38] sm:$0xff]
      %v329 = vld [vmem:[#allocation8 + $0x40] sm:$0xff]
      %v330 = vld [vmem:[#allocation8 + $0x48] sm:$0xff]
      %v331 = vld [vmem:[#allocation8 + $0x50] sm:$0xff]
      %v332 = vld [vmem:[#allocation8 + $0x58] sm:$0xff]
      %v333 = vld [vmem:[#allocation8 + $0x60] sm:$0xff]
      %v334 = vld [vmem:[#allocation8 + $0x68] sm:$0xff]
      %v335 = vld [vmem:[#allocation8 + $0x70] sm:$0xff]
      %v336 = vld [vmem:[#allocation8 + $0x78] sm:$0xff]
      %v337 = vmul.f32 %v321, 2.0
      %v338 = vmul.f32 %v322, 2.0
      %v339 = vmul.f32 %v323, 2.0
      %v340 = vmul.f32 %v324, 2.0
      %v341 = vmul.f32 %v325, 2.0
      %v342 = vmul.f32 %v326, 2.0
      %v343 = vmul.f32 %v327, 2.0
      %v344 = vmul.f32 %v328, 2.0
      %v345 = vmul.f32 %v329, 2.0
      %v346 = vmul.f32 %v330, 2.0
      %v347 = vmul.f32 %v331, 2.0
      %v348 = vmul.f32 %v332, 2.0
      %v349 = vmul.f32 %v333, 2.0
      %v350 = vmul.f32 %v334, 2.0
      %v351 = vmul.f32 %v335, 2.0
      %v352 = vmul.f32 %v336, 2.0
      %v353 = vld [vmem:[#allocation2] sm:$0xff]
      %v354 = vld [vmem:[#allocation2 + $0x8] sm:$0xff]
      %v355 = vld [vmem:[#allocation2 + $0x10] sm:$0xff]
      %v356 = vld [vmem:[#allocation2 + $0x18] sm:$0xff]
      %v357 = vld [vmem:[#allocation2 + $0x20] sm:$0xff]
      %v358 = vld [vmem:[#allocation2 + $0x28] sm:$0xff]
      %v359 = vld [vmem:[#allocation2 + $0x30] sm:$0xff]
      %v360 = vld [vmem:[#allocation2 + $0x38] sm:$0xff]
      %v361 = vld [vmem:[#allocation2 + $0x40] sm:$0xff]
      %v362 = vld [vmem:[#allocation2 + $0x48] sm:$0xff]
      %v363 = vld [vmem:[#allocation2 + $0x50] sm:$0xff]
      %v364 = vld [vmem:[#allocation2 + $0x58] sm:$0xff]
      %v365 = vld [vmem:[#allocation2 + $0x60] sm:$0xff]
      %v366 = vld [vmem:[#allocation2 + $0x68] sm:$0xff]
      %v367 = vld [vmem:[#allocation2 + $0x70] sm:$0xff]
      %v368 = vld [vmem:[#allocation2 + $0x78] sm:$0xff]
      %v369 = vsub.f32 %v337, %v353
      %v370 = vsub.f32 %v338, %v354
      %v371 = vsub.f32 %v339, %v355
      %v372 = vsub.f32 %v340, %v356
      %v373 = vsub.f32 %v341, %v357
      %v374 = vsub.f32 %v342, %v358
      %v375 = vsub.f32 %v343, %v359
      %v376 = vsub.f32 %v344, %v360
      %v377 = vsub.f32 %v345, %v361
      %v378 = vsub.f32 %v346, %v362
      %v379 = vsub.f32 %v347, %v363
      %v380 = vsub.f32 %v348, %v364
      %v381 = vsub.f32 %v349, %v365
      %v382 = vsub.f32 %v350, %v366
      %v383 = vsub.f32 %v351, %v367
      %v384 = vsub.f32 %v352, %v368
      %v385 = vld [vmem:[#allocation9] sm:$0xff]
      %v386 = vld [vmem:[#allocation9 + $0x8] sm:$0xff]
      %v387 = vld [vmem:[#allocation9 + $0x10] sm:$0xff]
      %v388 = vld [vmem:[#allocation9 + $0x18] sm:$0xff]
      %v389 = vld [vmem:[#allocation9 + $0x20] sm:$0xff]
      %v390 = vld [vmem:[#allocation9 + $0x28] sm:$0xff]
      %v391 = vld [vmem:[#allocation9 + $0x30] sm:$0xff]
      %v392 = vld [vmem:[#allocation9 + $0x38] sm:$0xff]
      %v393 = vld [vmem:[#allocation9 + $0x40] sm:$0xff]
      %v394 = vld [vmem:[#allocation9 + $0x48] sm:$0xff]
      %v395 = vld [vmem:[#allocation9 + $0x50] sm:$0xff]
      %v396 = vld [vmem:[#allocation9 + $0x58] sm:$0xff]
      %v397 = vld [vmem:[#allocation9 + $0x60] sm:$0xff]
      %v398 = vld [vmem:[#allocation9 + $0x68] sm:$0xff]
      %v399 = vld [vmem:[#allocation9 + $0x70] sm:$0xff]
      %v400 = vld [vmem:[#allocation9 + $0x78] sm:$0xff]
      %401 = vmatprep.subr.mxu0 0.0
      %402 = vmatpush1.msra.mxu0 %v385
      %403 = vmatprep.subr.mxu0 0.0
      %404 = vmatpush1.msra.mxu0 %v386
      %405 = vmatprep.subr.mxu0 0.0
      %406 = vmatpush1.msra.mxu0 %v387
      %407 = vmatprep.subr.mxu0 0.0
      %408 = vmatpush1.msra.mxu0 %v388
      %409 = vmatprep.subr.mxu0 0.0
      %410 = vmatpush1.msra.mxu0 %v389
      %411 = vmatprep.subr.mxu0 0.0
      %412 = vmatpush1.msra.mxu0 %v390
      %413 = vmatprep.subr.mxu0 0.0
      %414 = vmatpush1.msra.mxu0 %v391
      %415 = vmatprep.subr.mxu0 0.0
      %416 = vmatpush1.msra.mxu0 %v392
      %417 = vmatprep.subr.mxu0 0.0
      %418 = vmatpush1.msra.mxu0 %v393
      %419 = vmatprep.subr.mxu0 0.0
      %420 = vmatpush1.msra.mxu0 %v394
      %421 = vmatprep.subr.mxu0 0.0
      %422 = vmatpush1.msra.mxu0 %v395
      %423 = vmatprep.subr.mxu0 0.0
      %424 = vmatpush1.msra.mxu0 %v396
      %425 = vmatprep.subr.mxu0 0.0
      %426 = vmatpush1.msra.mxu0 %v397
      %427 = vmatprep.subr.mxu0 0.0
      %428 = vmatpush1.msra.mxu0 %v398
      %429 = vmatprep.subr.mxu0 0.0
      %430 = vmatpush1.msra.mxu0 %v399
      %431 = vmatprep.subr.mxu0 0.0
      %432 = vmatpush1.msra.mxu0 %v400
      %433 = vmatprep.subr.mxu0 0.0
      %434 = vmatpush1.msra.mxu0 0.0
      %435 = vmatprep.subr.mxu0 0.0
      %436 = vmatpush1.msra.mxu0 0.0
      %437 = vmatprep.subr.mxu0 0.0
      %438 = vmatpush1.msra.mxu0 0.0
      %439 = vmatprep.subr.mxu0 0.0
      %440 = vmatpush1.msra.mxu0 0.0
      %441 = vmatprep.subr.mxu0 0.0
      %442 = vmatpush1.msra.mxu0 0.0
      %443 = vmatprep.subr.mxu0 0.0
      %444 = vmatpush1.msra.mxu0 0.0
      %445 = vmatprep.subr.mxu0 0.0
      %446 = vmatpush1.msra.mxu0 0.0
      %447 = vmatprep.subr.mxu0 0.0
      %448 = vmatpush1.msra.mxu0 0.0
      %449 = vmatprep.subr.mxu0 0.0
      %450 = vmatpush1.msra.mxu0 0.0
      %451 = vmatprep.subr.mxu0 0.0
      %452 = vmatpush1.msra.mxu0 0.0
      %453 = vmatprep.subr.mxu0 0.0
      %454 = vmatpush1.msra.mxu0 0.0
      %455 = vmatprep.subr.mxu0 0.0
      %456 = vmatpush1.msra.mxu0 0.0
      %457 = vmatprep.subr.mxu0 0.0
      %458 = vmatpush1.msra.mxu0 0.0
      %459 = vmatprep.subr.mxu0 0.0
      %460 = vmatpush1.msra.mxu0 0.0
      %461 = vmatprep.subr.mxu0 0.0
      %462 = vmatpush1.msra.mxu0 0.0
      %463 = vmatprep.subr.mxu0 0.0
      %464 = vmatpush1.msra.mxu0 0.0
      %465 = vmatprep.mubr.f32.mxu0 0.0
      %466 = vmatmul.mubr.f32.gmra.mrb[0].mxu0 %v369
      %v467 = vpop.f32.mrb[0].mxu0
      %v468 = vadd.f32 0.0, %v467
      %v469 = vpop.f32.mrb[0].mxu0
      %470 = vmatprep.mubr.f32.mxu0 0.0
      %471 = vmatmul.mubr.f32.gmra.mrb[0].mxu0 %v370
      %v472 = vpop.f32.mrb[0].mxu0
      %v473 = vadd.f32 0.0, %v472
      %v474 = vpop.f32.mrb[0].mxu0
      %475 = vmatprep.mubr.f32.mxu0 0.0
      %476 = vmatmul.mubr.f32.gmra.mrb[0].mxu0 %v371
      %v477 = vpop.f32.mrb[0].mxu0
      %v478 = vadd.f32 0.0, %v477
      %v479 = vpop.f32.mrb[0].mxu0
      %480 = vmatprep.mubr.f32.mxu0 0.0
      %481 = vmatmul.mubr.f32.gmra.mrb[0].mxu0 %v372
      %v482 = vpop.f32.mrb[0].mxu0
      %v483 = vadd.f32 0.0, %v482
      %v484 = vpop.f32.mrb[0].mxu0
      %485 = vmatprep.mubr.f32.mxu0 0.0
      %486 = vmatmul.mubr.f32.gmra.mrb[0].mxu0 %v373
      %v487 = vpop.f32.mrb[0].mxu0
      %v488 = vadd.f32 0.0, %v487
      %v489 = vpop.f32.mrb[0].mxu0
      %490 = vmatprep.mubr.f32.mxu0 0.0
      %491 = vmatmul.mubr.f32.gmra.mrb[0].mxu0 %v374
      %v492 = vpop.f32.mrb[0].mxu0
      %v493 = vadd.f32 0.0, %v492
      %v494 = vpop.f32.mrb[0].mxu0
      %495 = vmatprep.mubr.f32.mxu0 0.0
      %496 = vmatmul.mubr.f32.gmra.mrb[0].mxu0 %v375
      %v497 = vpop.f32.mrb[0].mxu0
      %v498 = vadd.f32 0.0, %v497
      %v499 = vpop.f32.mrb[0].mxu0
      %500 = vmatprep.mubr.f32.mxu0 0.0
      %501 = vmatmul.mubr.f32.gmra.mrb[0].mxu0 %v376
      %v502 = vpop.f32.mrb[0].mxu0
      %v503 = vadd.f32 0.0, %v502
      %v504 = vpop.f32.mrb[0].mxu0
      %505 = vmatprep.mubr.f32.mxu0 0.0
      %506 = vmatmul.mubr.f32.gmra.mrb[0].mxu0 %v377
      %v507 = vpop.f32.mrb[0].mxu0
      %v508 = vadd.f32 0.0, %v507
      %v509 = vpop.f32.mrb[0].mxu0
      %510 = vmatprep.mubr.f32.mxu0 0.0
      %511 = vmatmul.mubr.f32.gmra.mrb[0].mxu0 %v378
      %v512 = vpop.f32.mrb[0].mxu0
      %v513 = vadd.f32 0.0, %v512
      %v514 = vpop.f32.mrb[0].mxu0
      %515 = vmatprep.mubr.f32.mxu0 0.0
      %516 = vmatmul.mubr.f32.gmra.mrb[0].mxu0 %v379
      %v517 = vpop.f32.mrb[0].mxu0
      %v518 = vadd.f32 0.0, %v517
      %v519 = vpop.f32.mrb[0].mxu0
      %520 = vmatprep.mubr.f32.mxu0 0.0
      %521 = vmatmul.mubr.f32.gmra.mrb[0].mxu0 %v380
      %v522 = vpop.f32.mrb[0].mxu0
      %v523 = vadd.f32 0.0, %v522
      %v524 = vpop.f32.mrb[0].mxu0
      %525 = vmatprep.mubr.f32.mxu0 0.0
      %526 = vmatmul.mubr.f32.gmra.mrb[0].mxu0 %v381
      %v527 = vpop.f32.mrb[0].mxu0
      %v528 = vadd.f32 0.0, %v527
      %v529 = vpop.f32.mrb[0].mxu0
      %530 = vmatprep.mubr.f32.mxu0 0.0
      %531 = vmatmul.mubr.f32.gmra.mrb[0].mxu0 %v382
      %v532 = vpop.f32.mrb[0].mxu0
      %v533 = vadd.f32 0.0, %v532
      %v534 = vpop.f32.mrb[0].mxu0
      %535 = vmatprep.mubr.f32.mxu0 0.0
      %536 = vmatmul.mubr.f32.gmra.mrb[0].mxu0 %v383
      %v537 = vpop.f32.mrb[0].mxu0
      %v538 = vadd.f32 0.0, %v537
      %v539 = vpop.f32.mrb[0].mxu0
      %540 = vmatprep.mubr.f32.mxu0 0.0
      %541 = vmatmul.mubr.f32.gmra.mrb[0].mxu0 %v384
      %v542 = vpop.f32.mrb[0].mxu0
      %v543 = vadd.f32 0.0, %v542
      %v544 = vpop.f32.mrb[0].mxu0
      %545 = vdwg.mxu0
      %v546 = vxor.u32 %v468, 2147483648
      %v547 = vxor.u32 %v473, 2147483648
      %v548 = vxor.u32 %v478, 2147483648
      %v549 = vxor.u32 %v483, 2147483648
      %v550 = vxor.u32 %v488, 2147483648
      %v551 = vxor.u32 %v493, 2147483648
      %v552 = vxor.u32 %v498, 2147483648
      %v553 = vxor.u32 %v503, 2147483648
      %v554 = vxor.u32 %v508, 2147483648
      %v555 = vxor.u32 %v513, 2147483648
      %v556 = vxor.u32 %v518, 2147483648
      %v557 = vxor.u32 %v523, 2147483648
      %v558 = vxor.u32 %v528, 2147483648
      %v559 = vxor.u32 %v533, 2147483648
      %v560 = vxor.u32 %v538, 2147483648
      %v561 = vxor.u32 %v543, 2147483648
      %v562 = vmul.f32 %v546, 1.442695
      %v563 = vpow.pop %v562
      %v564 = vmul.f32 %v547, 1.442695
      %v565 = vpow.pop %v564
      %v566 = vmul.f32 %v548, 1.442695
      %v567 = vpow.pop %v566
      %v568 = vmul.f32 %v549, 1.442695
      %v569 = vpow.pop %v568
      %v570 = vmul.f32 %v550, 1.442695
      %v571 = vpow.pop %v570
      %v572 = vmul.f32 %v551, 1.442695
      %v573 = vpow.pop %v572
      %v574 = vmul.f32 %v552, 1.442695
      %v575 = vpow.pop %v574
      %v576 = vmul.f32 %v553, 1.442695
      %v577 = vpow.pop %v576
      %v578 = vmul.f32 %v554, 1.442695
      %v579 = vpow.pop %v578
      %v580 = vmul.f32 %v555, 1.442695
      %v581 = vpow.pop %v580
      %v582 = vmul.f32 %v556, 1.442695
      %v583 = vpow.pop %v582
      %v584 = vmul.f32 %v557, 1.442695
      %v585 = vpow.pop %v584
      %v586 = vmul.f32 %v558, 1.442695
      %v587 = vpow.pop %v586
      %v588 = vmul.f32 %v559, 1.442695
      %v589 = vpow.pop %v588
      %v590 = vmul.f32 %v560, 1.442695
      %v591 = vpow.pop %v590
      %v592 = vmul.f32 %v561, 1.442695
      %v593 = vpow.pop %v592
      %v594 = vadd.f32 %v563, 1.0
      %v595 = vadd.f32 %v565, 1.0
      %v596 = vadd.f32 %v567, 1.0
      %v597 = vadd.f32 %v569, 1.0
      %v598 = vadd.f32 %v571, 1.0
      %v599 = vadd.f32 %v573, 1.0
      %v600 = vadd.f32 %v575, 1.0
      %v601 = vadd.f32 %v577, 1.0
      %v602 = vadd.f32 %v579, 1.0
      %v603 = vadd.f32 %v581, 1.0
      %v604 = vadd.f32 %v583, 1.0
      %v605 = vadd.f32 %v585, 1.0
      %v606 = vadd.f32 %v587, 1.0
      %v607 = vadd.f32 %v589, 1.0
      %v608 = vadd.f32 %v591, 1.0
      %v609 = vadd.f32 %v593, 1.0
      %v610 = vrcp.pop %v594
      %v611 = vmul.f32 1.0, %v610
      %v612 = vrcp.pop %v595
      %v613 = vmul.f32 1.0, %v612
      %v614 = vrcp.pop %v596
      %v615 = vmul.f32 1.0, %v614
      %v616 = vrcp.pop %v597
      %v617 = vmul.f32 1.0, %v616
      %v618 = vrcp.pop %v598
      %v619 = vmul.f32 1.0, %v618
      %v620 = vrcp.pop %v599
      %v621 = vmul.f32 1.0, %v620
      %v622 = vrcp.pop %v600
      %v623 = vmul.f32 1.0, %v622
      %v624 = vrcp.pop %v601
      %v625 = vmul.f32 1.0, %v624
      %v626 = vrcp.pop %v602
      %v627 = vmul.f32 1.0, %v626
      %v628 = vrcp.pop %v603
      %v629 = vmul.f32 1.0, %v628
      %v630 = vrcp.pop %v604
      %v631 = vmul.f32 1.0, %v630
      %v632 = vrcp.pop %v605
      %v633 = vmul.f32 1.0, %v632
      %v634 = vrcp.pop %v606
      %v635 = vmul.f32 1.0, %v634
      %v636 = vrcp.pop %v607
      %v637 = vmul.f32 1.0, %v636
      %v638 = vrcp.pop %v608
      %v639 = vmul.f32 1.0, %v638
      %v640 = vrcp.pop %v609
      %v641 = vmul.f32 1.0, %v640
      %642 = vst [vmem:[#allocation11] sm:$0xff] %v611
      %643 = vst [vmem:[#allocation11 + $0x8] sm:$0xff] %v613
      %644 = vst [vmem:[#allocation11 + $0x10] sm:$0xff] %v615
      %645 = vst [vmem:[#allocation11 + $0x18] sm:$0xff] %v617
      %646 = vst [vmem:[#allocation11 + $0x20] sm:$0xff] %v619
      %647 = vst [vmem:[#allocation11 + $0x28] sm:$0xff] %v621
      %648 = vst [vmem:[#allocation11 + $0x30] sm:$0xff] %v623
      %649 = vst [vmem:[#allocation11 + $0x38] sm:$0xff] %v625
      %650 = vst [vmem:[#allocation11 + $0x40] sm:$0xff] %v627
      %651 = vst [vmem:[#allocation11 + $0x48] sm:$0xff] %v629
      %652 = vst [vmem:[#allocation11 + $0x50] sm:$0xff] %v631
      %653 = vst [vmem:[#allocation11 + $0x58] sm:$0xff] %v633
      %654 = vst [vmem:[#allocation11 + $0x60] sm:$0xff] %v635
      %655 = vst [vmem:[#allocation11 + $0x68] sm:$0xff] %v637
      %656 = vst [vmem:[#allocation11 + $0x70] sm:$0xff] %v639
      %657 = vst [vmem:[#allocation11 + $0x78] sm:$0xff] %v641
    $region41: #{tpu_custom_call.1} parent=1 // pred_fallthru
      _
    // Predicated region
    $region42: #{tpu_custom_call.1} parent=1 // pred_check
      _
    $region43: #{tpu_custom_call.1} parent=1 // pred_check_branch
      %659 = sbr.rel (0) target = $region45
    $region44: #{tpu_custom_call.1} parent=1 // pred_region
      %s661 = ssub.s32 2048, 2048
      %662 = vsyncadd [#allocation5], %s661
      %s663 = sshll.u32 [#allocation11], 4
      %s664 = int_to_ptr.vmem [resolvable:$true] %s663
      %669 = dma.vmem_to_hbm [thread:$0]  %s664, 2048, %s4, [#allocation5], 128, 128, 8
    $region45: #{tpu_custom_call.1} parent=1 // pred_fallthru
      _
    // Predicated region
    $region46: #{tpu_custom_call.1} parent=1 // pred_check
      _
    $region47: #{tpu_custom_call.1} parent=1 // pred_check_branch
      %671 = sbr.rel (0) target = $region49
    $region48: #{tpu_custom_call.1} parent=1 // pred_region
      %672 = dma.done [#allocation5], 2048
    $region49: #{tpu_custom_call.1} parent=1 // pred_fallthru
      _
    %673 = vsyncpa [#allocation4], 1
    %674 = vsyncpa [#allocation7], 1
    %675 = vsyncpa [#allocation10], 1
    %676 = vsyncpa [#allocation5], 1

</llo_original>
